<compile_context>
chip_gen: v7x
topology: tpu7x:2x2x1
jax: 0.10.0
libtpu: 0.0.40
codegen_flags: <defaults>
</compile_context>

<pallas_src>
from functools import partial

import jax
import jax.numpy as jnp
import numpy as np
from jax import lax
from jax.experimental import pallas as pl
from jax.experimental.pallas import tpu as pltpu

LEAKY_SLOPE = 0.01  # PyTorch nn.LeakyReLU default negative_slope


# ----------------------------------------------------------------------------
# Main single-pass kernel: whole (b_blk, C, HW) tile per grid step.
# ----------------------------------------------------------------------------
def _channel_attention_kernel(x_ref, w1_ref, w2_ref, o_ref, *, inv_hw):
    # x_ref: (Bb, C, HW) full HW extent -> reductions respect the logical
    # shape, no manual masking needed.  Each consumer reads x_ref directly.
    avg = jnp.sum(x_ref[...], axis=-1, dtype=jnp.float32) * inv_hw   # (Bb, C)
    mx = jnp.max(x_ref[...], axis=-1).astype(jnp.float32)            # (Bb, C)

    bb = avg.shape[0]
    pooled = jnp.concatenate([avg, mx], axis=0)                      # (2Bb, C)

    w1 = w1_ref[...].astype(jnp.float32)                             # (C_r, C)
    w2 = w2_ref[...].astype(jnp.float32)                             # (C, C_r)

    h = lax.dot_general(pooled, w1, (((1,), (1,)), ((), ())),
                        preferred_element_type=jnp.float32)          # (2Bb, C_r)
    h = jnp.where(h > 0, h, LEAKY_SLOPE * h)
    o = lax.dot_general(h, w2, (((1,), (1,)), ((), ())),
                        preferred_element_type=jnp.float32)          # (2Bb, C)

    att = jnp.tanh(o[:bb] + o[bb:])                                  # (Bb, C)
    o_ref[...] = att[:, :, None].astype(o_ref.dtype) * x_ref[...]


# ----------------------------------------------------------------------------
# Fallback kernels (HW-split, two passes) for very large per-batch tensors.
# ----------------------------------------------------------------------------
def _pool_gate_kernel(x_ref, w1_ref, w2_ref, gate_ref, sum_sc, max_sc,
                      *, hw, hw_blk, neg):
    h = pl.program_id(1)
    nh = pl.num_programs(1)

    @pl.when(h == 0)
    def _():
        sum_sc[...] = jnp.zeros_like(sum_sc)
        max_sc[...] = jnp.full_like(max_sc, -jnp.inf)

    x = x_ref[...]                                     # (1, C, hw_blk)
    if hw % hw_blk != 0:
        # mask only the tail lanes of the (small) per-step slab
        lane = lax.broadcasted_iota(jnp.int32, x.shape, 2)
        valid = lane < (hw - h * hw_blk)
        xs = jnp.where(valid, x, jnp.zeros_like(x))
        xm = jnp.where(valid, x, jnp.full_like(x, neg))
    else:
        xs, xm = x, x

    sum_sc[...] += jnp.sum(xs, axis=-1, dtype=jnp.float32)            # (1, C)
    max_sc[...] = jnp.maximum(max_sc[...],
                              jnp.max(xm, axis=-1).astype(jnp.float32))

    @pl.when(h == nh - 1)
    def _():
        avg = sum_sc[...] * (1.0 / hw)                                 # (1, C)
        pooled = jnp.concatenate([avg, max_sc[...]], axis=0)           # (2, C)
        w1 = w1_ref[...].astype(jnp.float32)
        w2 = w2_ref[...].astype(jnp.float32)
        hmid = lax.dot_general(pooled, w1, (((1,), (1,)), ((), ())),
                               preferred_element_type=jnp.float32)
        hmid = jnp.where(hmid > 0, hmid, LEAKY_SLOPE * hmid)
        o = lax.dot_general(hmid, w2, (((1,), (1,)), ((), ())),
                            preferred_element_type=jnp.float32)        # (2, C)
        att = jnp.tanh(o[0:1] + o[1:2])                                # (1, C)
        gate_ref[...] = att.reshape(gate_ref.shape)                    # (1, C, 1)


def _scale_kernel(gate_ref, x_ref, o_ref):
    o_ref[...] = gate_ref[...].astype(o_ref.dtype) * x_ref[...]


# ----------------------------------------------------------------------------
# Wrapper
# ----------------------------------------------------------------------------
def _vmem_capacity_bytes():
    try:
        cap = int(pltpu.get_tpu_info().vmem_capacity_bytes)
        if cap >= (32 << 20):
            return cap
    except Exception:
        pass
    return 64 << 20  # conservative (v7x-safe) default


def _padded_per_batch_bytes(C, HW, itemsize):
    sub = {4: 8, 2: 16, 1: 32}.get(itemsize, 8)
    c_pad = -(-C // sub) * sub
    hw_pad = -(-HW // 128) * 128
    return c_pad * hw_pad * itemsize, c_pad


def _channel_attention_hw_split(x_flat, w1, w2, cap, tile_budget):
    """Two-pass path used when one batch element exceeds the tile budget."""
    B, C, HW = x_flat.shape
    C_r = w1.shape[0]
    dtype = x_flat.dtype
    itemsize = jnp.dtype(dtype).itemsize
    _, c_pad = _padded_per_batch_bytes(C, HW, itemsize)

    fb_budget = max(min(tile_budget, 4 << 20), c_pad * 128 * itemsize)
    hw_blk = max(128, (fb_budget // (c_pad * itemsize)) // 128 * 128)
    hw_blk = min(hw_blk, -(-HW // 128) * 128)
    n_hw = -(-HW // hw_blk)
    # TODO(synk): also split the channel axis for extremely large C (>~16K).

    if jnp.issubdtype(dtype, jnp.floating):
        neg = float(jnp.finfo(dtype).min)
    else:
        neg = int(jnp.iinfo(dtype).min)

    block_bytes = c_pad * hw_blk * itemsize
    vmem_limit = int(min(max(6 * block_bytes + (8 << 20), 32 << 20),
                         int(cap * 0.85)))

    pool = partial(_pool_gate_kernel, hw=HW, hw_blk=hw_blk, neg=neg)
    gate = pl.pallas_call(
        pool,
        out_shape=jax.ShapeDtypeStruct((B, C, 1), jnp.float32),
        grid_spec=pltpu.PrefetchScalarGridSpec(
            num_scalar_prefetch=0,
            grid=(B, n_hw),
            in_specs=[
                pl.BlockSpec((1, C, hw_blk), lambda b, h: (b, 0, h)),
                pl.BlockSpec((C_r, C), lambda b, h: (0, 0)),
                pl.BlockSpec((C, C_r), lambda b, h: (0, 0)),
            ],
            out_specs=pl.BlockSpec((1, C, 1), lambda b, h: (b, 0, 0)),
            scratch_shapes=[pltpu.VMEM((1, C), jnp.float32),
                            pltpu.VMEM((1, C), jnp.float32)],
        ),
        compiler_params=pltpu.CompilerParams(
            dimension_semantics=("parallel", "arbitrary"),
            vmem_limit_bytes=vmem_limit),
    )(x_flat, w1, w2)

    out_flat = pl.pallas_call(
        _scale_kernel,
        out_shape=jax.ShapeDtypeStruct((B, C, HW), dtype),
        grid_spec=pltpu.PrefetchScalarGridSpec(
            num_scalar_prefetch=0,
            grid=(B, n_hw),
            in_specs=[
                pl.BlockSpec((1, C, 1), lambda b, h: (b, 0, 0)),
                pl.BlockSpec((1, C, hw_blk), lambda b, h: (b, 0, h)),
            ],
            out_specs=pl.BlockSpec((1, C, hw_blk), lambda b, h: (b, 0, h)),
        ),
        compiler_params=pltpu.CompilerParams(
            dimension_semantics=("parallel", "parallel"),
            vmem_limit_bytes=vmem_limit),
    )(gate, x_flat)
    return out_flat


def channel_attention(x, w1, w2, *, tile_budget_bytes=None):
    """x: (B, C, H, W) NCHW; w1: (C_r, C); w2: (C, C_r). Returns (B, C, H, W)."""
    B, C, H, W = x.shape
    HW = H * W
    C_r = w1.shape[0]
    dtype = x.dtype
    itemsize = jnp.dtype(dtype).itemsize

    # Free reshape (collapses minor dims; no copy, no padding).
    x_flat = x.reshape(B, C, HW)

    cap = _vmem_capacity_bytes()
    tile_budget = cap // 8 if tile_budget_bytes is None else int(tile_budget_bytes)
    per_batch, _ = _padded_per_batch_bytes(C, HW, itemsize)

    if per_batch > tile_budget:
        # One batch element does not fit the per-tile budget: HW-split path.
        out_flat = _channel_attention_hw_split(x_flat, w1, w2, cap, tile_budget)
        return out_flat.reshape(B, C, H, W)

    # ---- batch blocking: as large as the budget allows, but keep enough grid
    #      steps for pipelining / megacore, and tiles >= ~1 MiB.
    b_mem = max(1, tile_budget // per_batch)
    b_blk = min(B, b_mem)
    steps_target = min(8, B)
    if B // b_blk < steps_target:
        b_min_tile = max(1, -(-(1 << 20) // per_batch))     # ~1 MiB tile floor
        b_blk = min(b_blk, max(max(1, B // steps_target), b_min_tile))
    b_blk = max(1, min(b_blk, B))
    # Largest divisor of B not exceeding b_blk -> grid divides B exactly,
    # so no batch padding (and no extra HBM pass) is needed.
    b_blk = max(d for d in range(1, b_blk + 1) if B % d == 0)
    grid = (B // b_blk,)

    # VMEM: double-buffered input + output tiles + weights + slack.
    # Never clamp the limit below the need (tiles were sized against cap//8).
    w_bytes = 2 * 4 * (C_r * C + C * C_r)
    vmem_need = 4 * b_blk * per_batch + w_bytes + (2 << 20)
    vmem_limit = int(min(max(vmem_need, 16 << 20), int(cap * 0.9)))

    kernel = partial(_channel_attention_kernel, inv_hw=1.0 / HW)
    out_flat = pl.pallas_call(
        kernel,
        out_shape=jax.ShapeDtypeStruct((B, C, HW), dtype),
        grid_spec=pltpu.PrefetchScalarGridSpec(
            num_scalar_prefetch=0,
            grid=grid,
            in_specs=[
                pl.BlockSpec((b_blk, C, HW), lambda b: (b, 0, 0)),
                pl.BlockSpec((C_r, C), lambda b: (0, 0)),
                pl.BlockSpec((C, C_r), lambda b: (0, 0)),
            ],
            out_specs=pl.BlockSpec((b_blk, C, HW), lambda b: (b, 0, 0)),
        ),
        compiler_params=pltpu.CompilerParams(
            dimension_semantics=("parallel",),
            vmem_limit_bytes=vmem_limit),
    )(x_flat, w1, w2)

    return out_flat.reshape(B, C, H, W)


# ----------------------------------------------------------------------------
# Pure-JAX reference matching the PyTorch forward exactly.
# ----------------------------------------------------------------------------
def channel_attention_ref(x, w1, w2):
    avg = jnp.mean(x, axis=(2, 3))                       # (B, C)
    mx = jnp.max(x, axis=(2, 3))                         # (B, C)

    def mlp(v):
        h = v @ w1.T
        h = jnp.where(h > 0, h, LEAKY_SLOPE * h)
        return h @ w2.T

    out = jnp.tanh(mlp(avg) + mlp(mx))[:, :, None, None]  # (B, C, 1, 1)
    return out * x


if __name__ == "__main__":
    key = jax.random.PRNGKey(0)
    B, C = 2, 32                          # in_planes=32 -> hidden = 32 // 16 = 2
    C_r = C // 16

    kx, k1, k2 = jax.random.split(key, 3)
    # Conv2d 1x1, bias=False weights: shapes (out, in)
    w1 = jax.random.normal(k1, (C_r, C), dtype=jnp.float32) * 0.1
    w2 = jax.random.normal(k2, (C, C_r), dtype=jnp.float32) * 0.1

    # 1) main path, HW not a multiple of 128 (14x14 = 196): full-extent block
    x = jax.random.normal(kx, (B, C, 14, 14), dtype=jnp.float32)
    out = jax.block_until_ready(channel_attention(x, w1, w2))
    ref = channel_attention_ref(x, w1, w2)
    np.testing.assert_allclose(np.asarray(out), np.asarray(ref),
                               rtol=2e-5, atol=2e-5)

    # 2) main path, aligned HW (16x16 = 256)
    x2 = jax.random.normal(kx, (B, C, 16, 16), dtype=jnp.float32)
    out2 = jax.block_until_ready(channel_attention(x2, w1, w2))
    ref2 = channel_attention_ref(x2, w1, w2)
    np.testing.assert_allclose(np.asarray(out2), np.asarray(ref2),
                               rtol=2e-5, atol=2e-5)

    # 3) HW-split fallback path (forced via a tiny tile budget)
    out_fb = jax.block_until_ready(
        channel_attention(x, w1, w2, tile_budget_bytes=16 * 1024))
    np.testing.assert_allclose(np.asarray(out_fb), np.asarray(ref),
                               rtol=2e-5, atol=2e-5)

    print("KERNEL_OK")
</pallas_src>

<mosaic_0001>
module attributes {stable_mosaic.version = 11 : i64} {
  func.func @_channel_attention_kernel(%arg0: i32, %arg1: memref<2x32x196xf32, #tpu.memory_space<vmem>>, %arg2: memref<2x32xf32, #tpu.memory_space<vmem>>, %arg3: memref<32x2xf32, #tpu.memory_space<vmem>>, %arg4: memref<2x32x196xf32, #tpu.memory_space<vmem>>) attributes {dimension_semantics = [#tpu.dimension_semantics<parallel>], iteration_bounds = array<i64: 1>, scalar_prefetch = 0 : i64, scratch_operands = 0 : i64, tpu.core_type = #tpu.core_type<tc>, window_params = [{transform_indices = @transform_0, window_bounds = array<i64: 2, 32, 196>}, {pipeline_mode = #tpu.pipeline_mode<synchronous>, transform_indices = @transform_1, window_bounds = array<i64: 2, 32>}, {pipeline_mode = #tpu.pipeline_mode<synchronous>, transform_indices = @transform_2, window_bounds = array<i64: 32, 2>}, {transform_indices = @transform_3, window_bounds = array<i64: 2, 32, 196>}]} {
    %c0 = arith.constant 0 : index
    %c0_0 = arith.constant 0 : index
    %c0_1 = arith.constant 0 : index
    %0 = vector.load %arg1[%c0, %c0_0, %c0_1] : memref<2x32x196xf32, #tpu.memory_space<vmem>>, vector<2x32x196xf32>
    %cst = arith.constant dense<0.000000e+00> : vector<2x32xf32>
    %1 = vector.multi_reduction <add>, %0, %cst [2] : vector<2x32x196xf32> to vector<2x32xf32>
    %cst_2 = arith.constant 0.00510204071 : f32
    %2 = vector.broadcast %cst_2 : f32 to vector<2x32xf32>
    %3 = arith.mulf %1, %2 : vector<2x32xf32>
    %c0_3 = arith.constant 0 : index
    %c0_4 = arith.constant 0 : index
    %c0_5 = arith.constant 0 : index
    %4 = vector.load %arg1[%c0_3, %c0_4, %c0_5] : memref<2x32x196xf32, #tpu.memory_space<vmem>>, vector<2x32x196xf32>
    %cst_6 = arith.constant dense<0xFF800000> : vector<2x32xf32>
    %5 = vector.multi_reduction <maximumf>, %4, %cst_6 [2] : vector<2x32x196xf32> to vector<2x32xf32>
    %6 = tpu.concatenate %3, %5 in 0 : vector<2x32xf32>, vector<2x32xf32> -> vector<4x32xf32>
    %c0_7 = arith.constant 0 : index
    %c0_8 = arith.constant 0 : index
    %7 = vector.load %arg2[%c0_7, %c0_8] : memref<2x32xf32, #tpu.memory_space<vmem>>, vector<2x32xf32>
    %c0_9 = arith.constant 0 : index
    %c0_10 = arith.constant 0 : index
    %8 = vector.load %arg3[%c0_9, %c0_10] : memref<32x2xf32, #tpu.memory_space<vmem>>, vector<32x2xf32>
    %cst_11 = arith.constant dense<0.000000e+00> : vector<4x2xf32>
    %9 = tpu.matmul %6, %7, %cst_11 {dimension_numbers = #tpu.dot_dimension_numbers<[1], [1], [0], [0], [0, 0, 1, 0], [], []>} : vector<4x32xf32>, vector<2x32xf32>, vector<4x2xf32> -> vector<4x2xf32>
    %cst_12 = arith.constant 0.000000e+00 : f32
    %10 = vector.broadcast %cst_12 : f32 to vector<4x2xf32>
    %11 = arith.cmpf ogt, %9, %10 : vector<4x2xf32>
    %cst_13 = arith.constant 0.00999999977 : f32
    %12 = vector.broadcast %cst_13 : f32 to vector<4x2xf32>
    %13 = arith.mulf %12, %9 : vector<4x2xf32>
    %14 = arith.select %11, %9, %13 : vector<4x2xi1>, vector<4x2xf32>
    %cst_14 = arith.constant dense<0.000000e+00> : vector<4x32xf32>
    %15 = tpu.matmul %14, %8, %cst_14 {dimension_numbers = #tpu.dot_dimension_numbers<[1], [1], [0], [0], [0, 0, 1, 0], [], []>} : vector<4x2xf32>, vector<32x2xf32>, vector<4x32xf32> -> vector<4x32xf32>
    %16 = vector.extract_strided_slice %15 {offsets = [0, 0], sizes = [2, 32], strides = [1, 1]} : vector<4x32xf32> to vector<2x32xf32>
    %17 = vector.extract_strided_slice %15 {offsets = [2, 0], sizes = [2, 32], strides = [1, 1]} : vector<4x32xf32> to vector<2x32xf32>
    %18 = arith.addf %16, %17 : vector<2x32xf32>
    %19 = math.tanh %18 : vector<2x32xf32>
    %20 = vector.shape_cast %19 : vector<2x32xf32> to vector<2x32x1xf32>
    %c0_15 = arith.constant 0 : index
    %c0_16 = arith.constant 0 : index
    %c0_17 = arith.constant 0 : index
    %21 = vector.load %arg1[%c0_15, %c0_16, %c0_17] : memref<2x32x196xf32, #tpu.memory_space<vmem>>, vector<2x32x196xf32>
    %22 = vector.broadcast %20 : vector<2x32x1xf32> to vector<2x32x196xf32>
    %23 = arith.mulf %22, %21 : vector<2x32x196xf32>
    %c0_18 = arith.constant 0 : index
    %c0_19 = arith.constant 0 : index
    %c0_20 = arith.constant 0 : index
    %24 = vector.load %arg4[%c0_18, %c0_19, %c0_20] : memref<2x32x196xf32, #tpu.memory_space<vmem>>, vector<2x32x196xf32>
    tpu.vector_store %arg4[%c0_18, %c0_19, %c0_20], %23 {strides = array<i32>} : memref<2x32x196xf32, #tpu.memory_space<vmem>>, vector<2x32x196xf32>,
    return
  }
  func.func @transform_0(%arg0: i32) -> (i32, i32, i32) {
    %c0_i32 = arith.constant 0 : i32
    %c0_i32_0 = arith.constant 0 : i32
    %c0_i32_1 = arith.constant 0 : i32
    return %arg0, %c0_i32, %c0_i32_0 : i32, i32, i32
  }
  func.func @transform_1(%arg0: i32) -> (i32, i32) {
    %c0_i32 = arith.constant 0 : i32
    %c0_i32_0 = arith.constant 0 : i32
    %c0_i32_1 = arith.constant 0 : i32
    return %c0_i32, %c0_i32_0 : i32, i32
  }
  func.func @transform_2(%arg0: i32) -> (i32, i32) {
    %c0_i32 = arith.constant 0 : i32
    %c0_i32_0 = arith.constant 0 : i32
    %c0_i32_1 = arith.constant 0 : i32
    return %c0_i32, %c0_i32_0 : i32, i32
  }
  func.func @transform_3(%arg0: i32) -> (i32, i32, i32) {
    %c0_i32 = arith.constant 0 : i32
    %c0_i32_0 = arith.constant 0 : i32
    %c0_i32_1 = arith.constant 0 : i32
    return %arg0, %c0_i32, %c0_i32_0 : i32, i32, i32
  }
}

</mosaic_0001>

<llo_original>
// kernel: tpu_custom_call.1
$region0: #{tpu_custom_call.1}
  #allocation0 [shape = 'u32[]', space=smem, size = 0x4, offset = 0x4, fixed_abs, tag = 'smem constant byte address 0x4 - core index']
  #allocation1 [shape = 'u32[144,128]{1,0:T(1,128)}', space=vmem, size = 0x12000, scoped, tag = 'internal scratch']
  %s0 = inlined_call_operand.hbm [shape: f32[2,32,196], index: 0, kind: input, shape index: {}]
  %s1 = inlined_call_operand.vmem [shape: f32[2,32], index: 1, kind: input, shape index: {}]
  %s2 = inlined_call_operand.vmem [shape: f32[32,2], index: 2, kind: input, shape index: {}]
  %s3 = inlined_call_operand.hbm [shape: f32[2,32,196], index: 3, kind: output, shape index: {}]
  %s4 = sld [smem:[#allocation0]]
  $region26: #{tpu_custom_call.1} parent=0
    _
  %s6 = ssub.s32 1, %s4
  %s7 = scalar_select 0, %s6, %s4
  $region1: #{tpu_custom_call.1} parent=0
    #allocation2 [shape = 'u8[65536]{0}', space=vmem, size = 0x10000, scoped, tag = 'input window, operand 0, single buffered']
    #allocation3 [shape = 's32[1]{0}', space=sflag, size = 0x4, scoped, tag = 'scoped memory for tpu_custom_call.1']
    #allocation4 [shape = 's32[1]{0}', space=sflag, size = 0x4, scoped, tag = 'scoped memory for tpu_custom_call.1']
    #allocation5 [shape = 'u8[65536]{0}', space=vmem, size = 0x10000, scoped, tag = 'output window, operand 0, single buffered']
    %8 = vsyncpa [#allocation3], 0
    %9 = vsyncpa [#allocation4], 0
    // Predicated region
    $region2: #{tpu_custom_call.1} parent=1 // pred_check
      _
    $region3: #{tpu_custom_call.1} parent=1 // pred_check_branch
      %11 = sbr.rel (0) target = $region5
    $region4: #{tpu_custom_call.1} parent=1 // pred_region
      %s13 = ssub.s32 2048, 2048
      %14 = vsyncadd [#allocation3], %s13
      %s15 = sshll.u32 [#allocation2], 4
      %s16 = int_to_ptr.vmem [resolvable:$true] %s15
      %21 = dma.hbm_to_vmem [thread:$0]  %s0, 2048, %s16, [#allocation3], 256, 256, 16
    $region5: #{tpu_custom_call.1} parent=1 // pred_fallthru
      _
    // Predicated region
    $region6: #{tpu_custom_call.1} parent=1 // pred_check
      _
    $region7: #{tpu_custom_call.1} parent=1 // pred_check_branch
      %23 = sbr.rel (0) target = $region9
    $region8: #{tpu_custom_call.1} parent=1 // pred_region
      _
    $region9: #{tpu_custom_call.1} parent=1 // pred_fallthru
      _
    // Predicated region
    $region10: #{tpu_custom_call.1} parent=1 // pred_check
      _
    $region11: #{tpu_custom_call.1} parent=1 // pred_check_branch
      %25 = sbr.rel (0) target = $region13
    $region12: #{tpu_custom_call.1} parent=1 // pred_region
      _
    $region13: #{tpu_custom_call.1} parent=1 // pred_fallthru
      _
    // Predicated region
    $region14: #{tpu_custom_call.1} parent=1 // pred_check
      _
    $region15: #{tpu_custom_call.1} parent=1 // pred_check_branch
      %27 = sbr.rel (0) target = $region17
    $region16: #{tpu_custom_call.1} parent=1 // pred_region
      %28 = dma.done [#allocation3], 2048
    $region17: #{tpu_custom_call.1} parent=1 // pred_fallthru
      _
    %v29 = vld [vmem:[#allocation2] sm:$0xff]
    %v30 = vld [vmem:[#allocation2 + $0x8] sm:$0xff]
    %v31 = vld [vmem:[#allocation2 + $0x10] sm:$0xff]
    %v32 = vld [vmem:[#allocation2 + $0x18] sm:$0xff]
    %v33 = vld [vmem:[#allocation2 + $0x20] sm:$0xff]
    %v34 = vld [vmem:[#allocation2 + $0x28] sm:$0xff]
    %v35 = vld [vmem:[#allocation2 + $0x30] sm:$0xff]
    %v36 = vld [vmem:[#allocation2 + $0x38] sm:$0xff]
    %v37 = vld [vmem:[#allocation2 + $0x40] sm:$0xff]
    %v38 = vld [vmem:[#allocation2 + $0x48] sm:$0xff]
    %v39 = vld [vmem:[#allocation2 + $0x50] sm:$0xff]
    %v40 = vld [vmem:[#allocation2 + $0x58] sm:$0xff]
    %v41 = vld [vmem:[#allocation2 + $0x60] sm:$0xff]
    %v42 = vld [vmem:[#allocation2 + $0x68] sm:$0xff]
    %v43 = vld [vmem:[#allocation2 + $0x70] sm:$0xff]
    %v44 = vld [vmem:[#allocation2 + $0x78] sm:$0xff]
    %vm45 = vcmask 556032
    %v46 = vsel %vm45, %v30, 0.0
    %v47 = vadd.f32 %v29, %v46
    %48 = vadd.xlane.f32.xlu0 %v47
    %v49 = vpop.xlane.xlu0 %48
    %v50 = vsel %vm45, %v32, 0.0
    %v51 = vadd.f32 %v31, %v50
    %52 = vadd.xlane.f32.xlu0 %v51
    %v53 = vpop.xlane.xlu0 %52
    %v54 = vsel %vm45, %v34, 0.0
    %v55 = vadd.f32 %v33, %v54
    %56 = vadd.xlane.f32.xlu0 %v55
    %v57 = vpop.xlane.xlu0 %56
    %v58 = vsel %vm45, %v36, 0.0
    %v59 = vadd.f32 %v35, %v58
    %60 = vadd.xlane.f32.xlu0 %v59
    %v61 = vpop.xlane.xlu0 %60
    %v62 = vsel %vm45, %v38, 0.0
    %v63 = vadd.f32 %v37, %v62
    %64 = vadd.xlane.f32.xlu0 %v63
    %v65 = vpop.xlane.xlu0 %64
    %v66 = vsel %vm45, %v40, 0.0
    %v67 = vadd.f32 %v39, %v66
    %68 = vadd.xlane.f32.xlu0 %v67
    %v69 = vpop.xlane.xlu0 %68
    %v70 = vsel %vm45, %v42, 0.0
    %v71 = vadd.f32 %v41, %v70
    %72 = vadd.xlane.f32.xlu0 %v71
    %v73 = vpop.xlane.xlu0 %72
    %v74 = vsel %vm45, %v44, 0.0
    %v75 = vadd.f32 %v43, %v74
    %76 = vadd.xlane.f32.xlu0 %v75
    %v77 = vpop.xlane.xlu0 %76
    %v78 = vmul.f32 %v49, 0.0051020407
    %v79 = vmul.f32 %v53, 0.0051020407
    %v80 = vmul.f32 %v57, 0.0051020407
    %v81 = vmul.f32 %v61, 0.0051020407
    %v82 = vmul.f32 %v65, 0.0051020407
    %v83 = vmul.f32 %v69, 0.0051020407
    %v84 = vmul.f32 %v73, 0.0051020407
    %v85 = vmul.f32 %v77, 0.0051020407
    %v86 = vsel %vm45, %v30, -inf
    %v87 = vmax.f32 %v29, %v86
    %88 = vmax.xlane.f32.xlu0 %v87
    %v89 = vpop.xlane.xlu0 %88
    %v90 = vsel %vm45, %v32, -inf
    %v91 = vmax.f32 %v31, %v90
    %92 = vmax.xlane.f32.xlu0 %v91
    %v93 = vpop.xlane.xlu0 %92
    %v94 = vsel %vm45, %v34, -inf
    %v95 = vmax.f32 %v33, %v94
    %96 = vmax.xlane.f32.xlu0 %v95
    %v97 = vpop.xlane.xlu0 %96
    %v98 = vsel %vm45, %v36, -inf
    %v99 = vmax.f32 %v35, %v98
    %100 = vmax.xlane.f32.xlu0 %v99
    %v101 = vpop.xlane.xlu0 %100
    %v102 = vsel %vm45, %v38, -inf
    %v103 = vmax.f32 %v37, %v102
    %104 = vmax.xlane.f32.xlu0 %v103
    %v105 = vpop.xlane.xlu0 %104
    %v106 = vsel %vm45, %v40, -inf
    %v107 = vmax.f32 %v39, %v106
    %108 = vmax.xlane.f32.xlu0 %v107
    %v109 = vpop.xlane.xlu0 %108
    %v110 = vsel %vm45, %v42, -inf
    %v111 = vmax.f32 %v41, %v110
    %112 = vmax.xlane.f32.xlu0 %v111
    %v113 = vpop.xlane.xlu0 %112
    %v114 = vsel %vm45, %v44, -inf
    %v115 = vmax.f32 %v43, %v114
    %116 = vmax.xlane.f32.xlu0 %v115
    %v117 = vpop.xlane.xlu0 %116
    %v126 = vlaneseq
    %v127 = vand.u32 %v126, 127
    %v128 = vlaneseq
    %v129 = vshrl.u32 %v128, 7
    %v130 = vsub.s32 %v127, %v129
    %v131 = vrot.slane %v78, %v130
    %v132 = vadd.s32 %v127, 4294967288
    %v133 = vlaneseq
    %v134 = vshrl.u32 %v133, 7
    %v135 = vsub.s32 %v132, %v134
    %v136 = vrot.slane %v79, %v135
    %vm137 = vcmask 130112
    %v138 = vsel %vm137, %v136, %v131
    %v139 = vadd.s32 %v127, 4294967280
    %v140 = vlaneseq
    %v141 = vshrl.u32 %v140, 7
    %v142 = vsub.s32 %v139, %v141
    %v143 = vrot.slane %v80, %v142
    %vm144 = vcmask 195712
    %v145 = vsel %vm144, %v143, %v138
    %v146 = vadd.s32 %v127, 4294967272
    %v147 = vlaneseq
    %v148 = vshrl.u32 %v147, 7
    %v149 = vsub.s32 %v146, %v148
    %v150 = vrot.slane %v81, %v149
    %vm151 = vcmask 261312
    %v152 = vsel %vm151, %v150, %v145
    %v153 = vlaneseq
    %v154 = vshrl.u32 %v153, 7
    %v155 = vsub.s32 %v127, %v154
    %v156 = vrot.slane %v82, %v155
    %v157 = vlaneseq
    %v158 = vshrl.u32 %v157, 7
    %v159 = vsub.s32 %v132, %v158
    %v160 = vrot.slane %v83, %v159
    %v161 = vsel %vm137, %v160, %v156
    %v162 = vlaneseq
    %v163 = vshrl.u32 %v162, 7
    %v164 = vsub.s32 %v139, %v163
    %v165 = vrot.slane %v84, %v164
    %v166 = vsel %vm144, %v165, %v161
    %v167 = vlaneseq
    %v168 = vshrl.u32 %v167, 7
    %v169 = vsub.s32 %v146, %v168
    %v170 = vrot.slane %v85, %v169
    %v171 = vsel %vm151, %v170, %v166
    %vm172 = vcmask 1041409
    %v173 = vsel %vm172, %v171, %v152
    %v183 = vlaneseq
    %v184 = vshrl.u32 %v183, 7
    %v185 = vsub.s32 %v127, %v184
    %v186 = vrot.slane %v89, %v185
    %v187 = vlaneseq
    %v188 = vshrl.u32 %v187, 7
    %v189 = vsub.s32 %v132, %v188
    %v190 = vrot.slane %v93, %v189
    %v191 = vsel %vm137, %v190, %v186
    %v192 = vlaneseq
    %v193 = vshrl.u32 %v192, 7
    %v194 = vsub.s32 %v139, %v193
    %v195 = vrot.slane %v97, %v194
    %v196 = vsel %vm144, %v195, %v191
    %v197 = vlaneseq
    %v198 = vshrl.u32 %v197, 7
    %v199 = vsub.s32 %v146, %v198
    %v200 = vrot.slane %v101, %v199
    %v201 = vsel %vm151, %v200, %v196
    %v202 = vlaneseq
    %v203 = vshrl.u32 %v202, 7
    %v204 = vsub.s32 %v127, %v203
    %v205 = vrot.slane %v105, %v204
    %v206 = vlaneseq
    %v207 = vshrl.u32 %v206, 7
    %v208 = vsub.s32 %v132, %v207
    %v209 = vrot.slane %v109, %v208
    %v210 = vsel %vm137, %v209, %v205
    %v211 = vlaneseq
    %v212 = vshrl.u32 %v211, 7
    %v213 = vsub.s32 %v139, %v212
    %v214 = vrot.slane %v113, %v213
    %v215 = vsel %vm144, %v214, %v210
    %v216 = vlaneseq
    %v217 = vshrl.u32 %v216, 7
    %v218 = vsub.s32 %v146, %v217
    %v219 = vrot.slane %v117, %v218
    %v220 = vsel %vm151, %v219, %v215
    %vm221 = vcmask 1043459
    %v222 = vsel %vm221, %v220, %v201
    %vm224 = vcmask 1041408
    %v225 = vsel %vm224, %v173, %v222
    %v226 = vld [vmem:[%s1] sm:$0x3]
    %v227 = vld [vmem:[%s2] sm:$0xff]
    %v228 = vld [vmem:[%s2 + $0x8] sm:$0xff]
    %v229 = vld [vmem:[%s2 + $0x10] sm:$0xff]
    %v230 = vld [vmem:[%s2 + $0x18] sm:$0xff]
    %vm231 = vcmask 261120
    %v233 = vsel %vm231, %v225, 0
    %v236 = vsel %vm231, %v226, 0
    %238 = vmatprep.subr.mxu0 0.0
    %239 = vmatpush1.xpose.msra.mxu0 %v236
    %240 = vmatprep.subr.mxu0 0.0
    %241 = vmatpush1.xpose.msra.mxu0 0.0
    %242 = vmatprep.subr.mxu0 0.0
    %243 = vmatpush1.xpose.msra.mxu0 0.0
    %244 = vmatprep.subr.mxu0 0.0
    %245 = vmatpush1.xpose.msra.mxu0 0.0
    %246 = vmatprep.subr.mxu0 0.0
    %247 = vmatpush1.xpose.msra.mxu0 0.0
    %248 = vmatprep.subr.mxu0 0.0
    %249 = vmatpush1.xpose.msra.mxu0 0.0
    %250 = vmatprep.subr.mxu0 0.0
    %251 = vmatpush1.xpose.msra.mxu0 0.0
    %252 = vmatprep.subr.mxu0 0.0
    %253 = vmatpush1.xpose.msra.mxu0 0.0
    %254 = vmatprep.subr.mxu0 0.0
    %255 = vmatpush1.xpose.msra.mxu0 0.0
    %256 = vmatprep.subr.mxu0 0.0
    %257 = vmatpush1.xpose.msra.mxu0 0.0
    %258 = vmatprep.subr.mxu0 0.0
    %259 = vmatpush1.xpose.msra.mxu0 0.0
    %260 = vmatprep.subr.mxu0 0.0
    %261 = vmatpush1.xpose.msra.mxu0 0.0
    %262 = vmatprep.subr.mxu0 0.0
    %263 = vmatpush1.xpose.msra.mxu0 0.0
    %264 = vmatprep.subr.mxu0 0.0
    %265 = vmatpush1.xpose.msra.mxu0 0.0
    %266 = vmatprep.subr.mxu0 0.0
    %267 = vmatpush1.xpose.msra.mxu0 0.0
    %268 = vmatprep.subr.mxu0 0.0
    %269 = vmatpush1.xpose.msra.mxu0 0.0
    %270 = vmatprep.subr.mxu0 0.0
    %271 = vmatpush1.xpose.msra.mxu0 0.0
    %272 = vmatprep.subr.mxu0 0.0
    %273 = vmatpush1.xpose.msra.mxu0 0.0
    %274 = vmatprep.subr.mxu0 0.0
    %275 = vmatpush1.xpose.msra.mxu0 0.0
    %276 = vmatprep.subr.mxu0 0.0
    %277 = vmatpush1.xpose.msra.mxu0 0.0
    %278 = vmatprep.subr.mxu0 0.0
    %279 = vmatpush1.xpose.msra.mxu0 0.0
    %280 = vmatprep.subr.mxu0 0.0
    %281 = vmatpush1.xpose.msra.mxu0 0.0
    %282 = vmatprep.subr.mxu0 0.0
    %283 = vmatpush1.xpose.msra.mxu0 0.0
    %284 = vmatprep.subr.mxu0 0.0
    %285 = vmatpush1.xpose.msra.mxu0 0.0
    %286 = vmatprep.subr.mxu0 0.0
    %287 = vmatpush1.xpose.msra.mxu0 0.0
    %288 = vmatprep.subr.mxu0 0.0
    %289 = vmatpush1.xpose.msra.mxu0 0.0
    %290 = vmatprep.subr.mxu0 0.0
    %291 = vmatpush1.xpose.msra.mxu0 0.0
    %292 = vmatprep.subr.mxu0 0.0
    %293 = vmatpush1.xpose.msra.mxu0 0.0
    %294 = vmatprep.subr.mxu0 0.0
    %295 = vmatpush1.xpose.msra.mxu0 0.0
    %296 = vmatprep.subr.mxu0 0.0
    %297 = vmatpush1.xpose.msra.mxu0 0.0
    %298 = vmatprep.subr.mxu0 0.0
    %299 = vmatpush1.xpose.msra.mxu0 0.0
    %300 = vmatprep.subr.mxu0 0.0
    %301 = vmatpush1.xpose.msra.mxu0 0.0
    %302 = vmatprep.mubr.f32.mxu0 0.0
    %303 = vmatmul.mubr.f32.gmra.mrb[0].mxu0 %v233
    %v304 = vpop.f32.mrb[0].mxu0
    %v305 = vadd.f32 0.0, %v304
    %v306 = vpop.f32.mrb[0].mxu0
    %307 = vdwg.mxu0
    %vm308 = vcmp.gt.f32.partialorder %v305, 0.0
    %v309 = vmul.f32 %v305, 0.01
    %v310 = vsel %vm308, %v305, %v309
    %vm311 = vcmask 15360
    %v313 = vsel %vm311, %v310, 0
    %v316 = vsel %vm311, %v227, 0
    %v319 = vsel %vm311, %v228, 0
    %v322 = vsel %vm311, %v229, 0
    %v325 = vsel %vm311, %v230, 0
    %327 = vmatprep.subr.mxu0 0.0
    %328 = vmatpush1.xpose.msra.mxu0 %v316
    %329 = vmatprep.subr.mxu0 0.0
    %330 = vmatpush1.xpose.msra.mxu0 %v319
    %331 = vmatprep.subr.mxu0 0.0
    %332 = vmatpush1.xpose.msra.mxu0 %v322
    %333 = vmatprep.subr.mxu0 0.0
    %334 = vmatpush1.xpose.msra.mxu0 %v325
    %335 = vmatprep.subr.mxu0 0.0
    %336 = vmatpush1.xpose.msra.mxu0 0.0
    %337 = vmatprep.subr.mxu0 0.0
    %338 = vmatpush1.xpose.msra.mxu0 0.0
    %339 = vmatprep.subr.mxu0 0.0
    %340 = vmatpush1.xpose.msra.mxu0 0.0
    %341 = vmatprep.subr.mxu0 0.0
    %342 = vmatpush1.xpose.msra.mxu0 0.0
    %343 = vmatprep.subr.mxu0 0.0
    %344 = vmatpush1.xpose.msra.mxu0 0.0
    %345 = vmatprep.subr.mxu0 0.0
    %346 = vmatpush1.xpose.msra.mxu0 0.0
    %347 = vmatprep.subr.mxu0 0.0
    %348 = vmatpush1.xpose.msra.mxu0 0.0
    %349 = vmatprep.subr.mxu0 0.0
    %350 = vmatpush1.xpose.msra.mxu0 0.0
    %351 = vmatprep.subr.mxu0 0.0
    %352 = vmatpush1.xpose.msra.mxu0 0.0
    %353 = vmatprep.subr.mxu0 0.0
    %354 = vmatpush1.xpose.msra.mxu0 0.0
    %355 = vmatprep.subr.mxu0 0.0
    %356 = vmatpush1.xpose.msra.mxu0 0.0
    %357 = vmatprep.subr.mxu0 0.0
    %358 = vmatpush1.xpose.msra.mxu0 0.0
    %359 = vmatprep.subr.mxu0 0.0
    %360 = vmatpush1.xpose.msra.mxu0 0.0
    %361 = vmatprep.subr.mxu0 0.0
    %362 = vmatpush1.xpose.msra.mxu0 0.0
    %363 = vmatprep.subr.mxu0 0.0
    %364 = vmatpush1.xpose.msra.mxu0 0.0
    %365 = vmatprep.subr.mxu0 0.0
    %366 = vmatpush1.xpose.msra.mxu0 0.0
    %367 = vmatprep.subr.mxu0 0.0
    %368 = vmatpush1.xpose.msra.mxu0 0.0
    %369 = vmatprep.subr.mxu0 0.0
    %370 = vmatpush1.xpose.msra.mxu0 0.0
    %371 = vmatprep.subr.mxu0 0.0
    %372 = vmatpush1.xpose.msra.mxu0 0.0
    %373 = vmatprep.subr.mxu0 0.0
    %374 = vmatpush1.xpose.msra.mxu0 0.0
    %375 = vmatprep.subr.mxu0 0.0
    %376 = vmatpush1.xpose.msra.mxu0 0.0
    %377 = vmatprep.subr.mxu0 0.0
    %378 = vmatpush1.xpose.msra.mxu0 0.0
    %379 = vmatprep.subr.mxu0 0.0
    %380 = vmatpush1.xpose.msra.mxu0 0.0
    %381 = vmatprep.subr.mxu0 0.0
    %382 = vmatpush1.xpose.msra.mxu0 0.0
    %383 = vmatprep.subr.mxu0 0.0
    %384 = vmatpush1.xpose.msra.mxu0 0.0
    %385 = vmatprep.subr.mxu0 0.0
    %386 = vmatpush1.xpose.msra.mxu0 0.0
    %387 = vmatprep.subr.mxu0 0.0
    %388 = vmatpush1.xpose.msra.mxu0 0.0
    %389 = vmatprep.subr.mxu0 0.0
    %390 = vmatpush1.xpose.msra.mxu0 0.0
    %391 = vmatprep.mubr.f32.mxu0 0.0
    %392 = vmatmul.mubr.f32.gmra.mrb[0].mxu0 %v313
    %v393 = vpop.f32.mrb[0].mxu0
    %v394 = vadd.f32 0.0, %v393
    %v395 = vpop.f32.mrb[0].mxu0
    %396 = vdwg.mxu0
    %v398 = vrot.slane %v394, 2
    %v400 = vadd.f32 %v394, %v398
    %v401 = vtanh.pop %v400
    %v402 = vlaneseq
    %v403 = vshrl.u32 %v402, 7
    %v404 = vsub.s32 0, %v403
    %v405 = vrot.slane %v401, %v404
    %407 = vbcast.lane.b32.xlu0 %v405, 256
    %v408 = vpop.permute.xlu0 %407
    %s410 = sor.u32 256, 8
    %411 = vbcast.lane.b32.xlu0 %v405, %s410
    %v412 = vpop.permute.xlu0 %411
    %s414 = sor.u32 256, 16
    %415 = vbcast.lane.b32.xlu0 %v405, %s414
    %v416 = vpop.permute.xlu0 %415
    %s418 = sor.u32 256, 24
    %419 = vbcast.lane.b32.xlu0 %v405, %s418
    %v420 = vpop.permute.xlu0 %419
    %v421 = vlaneseq
    %v422 = vshrl.u32 %v421, 7
    %v423 = vsub.s32 1, %v422
    %v424 = vrot.slane %v401, %v423
    %426 = vbcast.lane.b32.xlu0 %v424, 256
    %v427 = vpop.permute.xlu0 %426
    %s429 = sor.u32 256, 8
    %430 = vbcast.lane.b32.xlu0 %v424, %s429
    %v431 = vpop.permute.xlu0 %430
    %s433 = sor.u32 256, 16
    %434 = vbcast.lane.b32.xlu0 %v424, %s433
    %v435 = vpop.permute.xlu0 %434
    %s437 = sor.u32 256, 24
    %438 = vbcast.lane.b32.xlu0 %v424, %s437
    %v439 = vpop.permute.xlu0 %438
    %v440 = vmul.f32 %v408, %v29
    %v441 = vmul.f32 %v408, %v30
    %v442 = vmul.f32 %v412, %v31
    %v443 = vmul.f32 %v412, %v32
    %v444 = vmul.f32 %v416, %v33
    %v445 = vmul.f32 %v416, %v34
    %v446 = vmul.f32 %v420, %v35
    %v447 = vmul.f32 %v420, %v36
    %v448 = vmul.f32 %v427, %v37
    %v449 = vmul.f32 %v427, %v38
    %v450 = vmul.f32 %v431, %v39
    %v451 = vmul.f32 %v431, %v40
    %v452 = vmul.f32 %v435, %v41
    %v453 = vmul.f32 %v435, %v42
    %v454 = vmul.f32 %v439, %v43
    %v455 = vmul.f32 %v439, %v44
    %456 = vst [vmem:[#allocation5] sm:$0xff] %v440
    %457 = vst.msk [vmem:[#allocation5 + $0x8] sm:$0xff] %vm45, %v441
    %458 = vst [vmem:[#allocation5 + $0x10] sm:$0xff] %v442
    %459 = vst.msk [vmem:[#allocation5 + $0x18] sm:$0xff] %vm45, %v443
    %460 = vst [vmem:[#allocation5 + $0x20] sm:$0xff] %v444
    %461 = vst.msk [vmem:[#allocation5 + $0x28] sm:$0xff] %vm45, %v445
    %462 = vst [vmem:[#allocation5 + $0x30] sm:$0xff] %v446
    %463 = vst.msk [vmem:[#allocation5 + $0x38] sm:$0xff] %vm45, %v447
    %464 = vst [vmem:[#allocation5 + $0x40] sm:$0xff] %v448
    %465 = vst.msk [vmem:[#allocation5 + $0x48] sm:$0xff] %vm45, %v449
    %466 = vst [vmem:[#allocation5 + $0x50] sm:$0xff] %v450
    %467 = vst.msk [vmem:[#allocation5 + $0x58] sm:$0xff] %vm45, %v451
    %468 = vst [vmem:[#allocation5 + $0x60] sm:$0xff] %v452
    %469 = vst.msk [vmem:[#allocation5 + $0x68] sm:$0xff] %vm45, %v453
    %470 = vst [vmem:[#allocation5 + $0x70] sm:$0xff] %v454
    %471 = vst.msk [vmem:[#allocation5 + $0x78] sm:$0xff] %vm45, %v455
    // Predicated region
    $region18: #{tpu_custom_call.1} parent=1 // pred_check
      _
    $region19: #{tpu_custom_call.1} parent=1 // pred_check_branch
      %473 = sbr.rel (0) target = $region21
    $region20: #{tpu_custom_call.1} parent=1 // pred_region
      %s475 = ssub.s32 2048, 2048
      %476 = vsyncadd [#allocation4], %s475
      %s477 = sshll.u32 [#allocation5], 4
      %s478 = int_to_ptr.vmem [resolvable:$true] %s477
      %483 = dma.vmem_to_hbm [thread:$0]  %s478, 2048, %s3, [#allocation4], 256, 256, 16
    $region21: #{tpu_custom_call.1} parent=1 // pred_fallthru
      _
    // Predicated region
    $region22: #{tpu_custom_call.1} parent=1 // pred_check
      _
    $region23: #{tpu_custom_call.1} parent=1 // pred_check_branch
      %485 = sbr.rel (0) target = $region25
    $region24: #{tpu_custom_call.1} parent=1 // pred_region
      %486 = dma.done [#allocation4], 2048
    $region25: #{tpu_custom_call.1} parent=1 // pred_fallthru
      _
    %487 = vsyncpa [#allocation3], 1
    %488 = vsyncpa [#allocation4], 1

</llo_original>
